<compile_context>
chip_gen: v7x
topology: tpu7x:2x2x1
jax: 0.10.0
libtpu: 0.0.40
codegen_flags: <defaults>
</compile_context>

<pallas_src>
import functools

import jax
import jax.numpy as jnp
from jax import lax
from jax.experimental import pallas as pl
from jax.experimental.pallas import tpu as pltpu


_CH = 14  # 3 pred_trans + 3 gt_trans + 4 pred_rot + 4 gt_rot channels


# --------------------------------- kernel ----------------------------------- #

def _loss_kernel(x_ref, out_ref, acc_ref, *,
                 inv_batch, w_t, w_r, w_s, w_d, min_motion, target_motion):
    i = pl.program_id(1)                        # batch-block (reduction) axis

    @pl.when(i == 0)
    def _():
        acc_ref[...] = jnp.zeros_like(acc_ref)

    # Channel planes, each (8, block_c); batch is spread over sublanes x lanes.
    pt0, pt1, pt2 = x_ref[0], x_ref[1], x_ref[2]                     # pred_trans
    gt0, gt1, gt2 = x_ref[3], x_ref[4], x_ref[5]                     # gt_trans
    pr0, pr1, pr2, pr3 = x_ref[6], x_ref[7], x_ref[8], x_ref[9]      # pred_rot
    gr0, gr1, gr2, gr3 = x_ref[10], x_ref[11], x_ref[12], x_ref[13]  # gt_rot

    # ---- translation L1 (sum over the 3 coordinates) ----
    trans = jnp.abs(pt0 - gt0) + jnp.abs(pt1 - gt1) + jnp.abs(pt2 - gt2)

    # ---- rotation geodesic angle: 2*acos(|<p,q>| / (|p||q|)) ----
    pr_sq = pr0 * pr0 + pr1 * pr1 + pr2 * pr2 + pr3 * pr3
    gr_sq = gr0 * gr0 + gr1 * gr1 + gr2 * gr2 + gr3 * gr3
    dot_raw = pr0 * gr0 + pr1 * gr1 + pr2 * gr2 + pr3 * gr3
    inv_norm = lax.rsqrt(jnp.maximum(pr_sq * gr_sq, 1e-24))
    xa = jnp.minimum(jnp.abs(dot_raw * inv_norm), 1.0)
    # acos(x) ~= sqrt(1-x) * poly(x)  (A&S 4.4.45, |err| <= 5e-5 rad, x in [0,1])
    acos = jnp.sqrt(jnp.maximum(1.0 - xa, 0.0)) * (
        1.5707288 + xa * (-0.2121144 + xa * (0.0742610 + xa * (-0.0187293))))
    ang = 2.0 * acos

    # ---- motion magnitude penalties ----
    mag = jnp.sqrt(pt0 * pt0 + pt1 * pt1 + pt2 * pt2)
    small = jnp.maximum(min_motion - mag, 0.0)
    dev = (mag - target_motion) * (mag - target_motion)

    acc_ref[...] += w_t * trans + w_r * ang + w_s * small + w_d * dev

    @pl.when(i == pl.num_programs(1) - 1)
    def _():
        total = jnp.sum(acc_ref[...]) * inv_batch          # single XLU reduce
        out_ref[...] = jnp.broadcast_to(total, out_ref.shape).astype(out_ref.dtype)


# -------------------------------- wrapper ----------------------------------- #

def relative_motion_loss(pred_trans, pred_rot, gt_trans, gt_rot,
                         trans_weight=1.0, rot_weight=0.1,
                         min_motion=5.0, target_motion=50.0,
                         block_lanes=4096):
    f32 = jnp.float32
    assert pred_trans.ndim == 2 and pred_trans.shape[1] == 3
    assert pred_rot.ndim == 2 and pred_rot.shape[1] == 4
    B = pred_trans.shape[0]

    # --- batch tiling: 8 sublanes x c_total lanes, lane axis tiled by block_c --
    block_c = max(128, (int(block_lanes) // 128) * 128)
    c_need = -(-B // 8)                    # lanes needed for B over 8 sublanes
    c_need = -(-c_need // 128) * 128       # lane dim must be a multiple of 128
    block_c = min(block_c, c_need)
    nb_total = -(-c_need // block_c)
    nc = 2 if nb_total >= 2 else 1         # 2-way TensorCore split (helps v7x)
    nb = -(-nb_total // nc)
    c_total = nc * nb * block_c
    b_pad = 8 * c_total

    # --- pack the four inputs into one lane/sublane-dense (14, 8, C) slab -----
    # Neutral padding rows contribute exactly zero to every loss term
    # (requires target_motion >= min_motion, true for the module defaults).
    t = float(target_motion)
    neutral = jnp.array([t, 0., 0.,  t, 0., 0.,
                         1., 0., 0., 0.,  1., 0., 0., 0.], f32)
    cols = jnp.concatenate(
        [pred_trans.astype(f32), gt_trans.astype(f32),
         pred_rot.astype(f32), gt_rot.astype(f32)], axis=1)          # (B, 14)
    pad_rows = b_pad - B
    if pad_rows:
        cols = jnp.concatenate(
            [cols, jnp.broadcast_to(neutral, (pad_rows, _CH))], axis=0)
    packed = cols.T.reshape(_CH, 8, c_total)                         # (14, 8, C)

    kernel = functools.partial(
        _loss_kernel,
        inv_batch=1.0 / B,
        w_t=float(trans_weight) / 300.0,   # trans_weight * mean(|.|)/100, 3 coords
        w_r=float(rot_weight),
        w_s=0.1 / 10.0,
        w_d=0.01 / 10000.0,
        min_motion=float(min_motion),
        target_motion=t)

    partials = pl.pallas_call(
        kernel,
        out_shape=jax.ShapeDtypeStruct((nc, 8, 128), f32),
        grid_spec=pltpu.PrefetchScalarGridSpec(
            num_scalar_prefetch=0,
            grid=(nc, nb),
            in_specs=[pl.BlockSpec((_CH, 8, block_c),
                                   lambda c, i: (0, 0, c * nb + i))],
            out_specs=pl.BlockSpec((1, 8, 128), lambda c, i: (c, 0, 0)),
            scratch_shapes=[pltpu.VMEM((8, block_c), f32)]),
        compiler_params=pltpu.CompilerParams(
            dimension_semantics=("parallel", "arbitrary")),
    )(packed)

    # Each core's (1, 8, 128) partial is a broadcast scalar; add the cores.
    return jnp.sum(partials[:, 0, 0])


# --------------------------- pure-JAX reference ------------------------------ #

def _reference_loss(pred_trans, pred_rot, gt_trans, gt_rot,
                    trans_weight=1.0, rot_weight=0.1,
                    min_motion=5.0, target_motion=50.0):
    trans_loss = jnp.mean(jnp.abs(pred_trans - gt_trans)) / 100.0
    pr = pred_rot / (jnp.linalg.norm(pred_rot, axis=-1, keepdims=True) + 1e-6)
    gr = gt_rot / (jnp.linalg.norm(gt_rot, axis=-1, keepdims=True) + 1e-6)
    dot = jnp.clip(jnp.sum(pr * gr, axis=-1), -1.0, 1.0)
    rot_loss = jnp.mean(2.0 * jnp.arccos(jnp.abs(dot)))
    mag = jnp.linalg.norm(pred_trans, axis=-1)
    small = jnp.mean(jax.nn.relu(min_motion - mag)) / 10.0
    dev = jnp.mean((mag - target_motion) ** 2) / 10000.0
    return (trans_weight * trans_loss + rot_weight * rot_loss
            + 0.1 * small + 0.01 * dev)


# ----------------------------------- main ------------------------------------ #

if __name__ == "__main__":
    key = jax.random.PRNGKey(0)
    k1, k2, k3, k4 = jax.random.split(key, 4)

    B = 16
    pred_trans = jax.random.normal(k1, (B, 3), jnp.float32) * 30.0
    gt_trans = jax.random.normal(k2, (B, 3), jnp.float32) * 30.0
    pred_rot = jax.random.normal(k3, (B, 4), jnp.float32)
    gt_rot = jax.random.normal(k4, (B, 4), jnp.float32)

    # jit so the packing (concat/pad/transpose) fuses with the pallas_call.
    loss_fn = jax.jit(relative_motion_loss)
    loss = jax.block_until_ready(loss_fn(pred_trans, pred_rot, gt_trans, gt_rot))

    ref = _reference_loss(pred_trans, pred_rot, gt_trans, gt_rot)
    assert jnp.allclose(loss, ref, rtol=1e-3, atol=1e-3), (loss, ref)

    print("KERNEL_OK")
</pallas_src>

<mosaic_0001>
module attributes {stable_mosaic.version = 11 : i64} {
  func.func @_loss_kernel(%arg0: i32, %arg1: i32, %arg2: memref<14x8x128xf32, #tpu.memory_space<vmem>>, %arg3: memref<1x8x128xf32, #tpu.memory_space<vmem>>, %arg4: memref<8x128xf32, #tpu.memory_space<vmem>>) attributes {dimension_semantics = [#tpu.dimension_semantics<parallel>, #tpu.dimension_semantics<arbitrary>], iteration_bounds = array<i64: 1, 1>, scalar_prefetch = 0 : i64, scratch_operands = 1 : i64, tpu.core_type = #tpu.core_type<tc>, window_params = [{transform_indices = @transform_0, window_bounds = array<i64: 14, 8, 128>}, {transform_indices = @transform_1, window_bounds = array<i64: 1, 8, 128>}]} {
    %c0_i32 = arith.constant 0 : i32
    %0 = arith.cmpi eq, %arg1, %c0_i32 : i32
    %1 = arith.extui %0 : i1 to i32
    %c0_i32_0 = arith.constant 0 : i32
    %2 = arith.cmpi ne, %1, %c0_i32_0 : i32
    scf.if %2 {
      %cst_51 = arith.constant 0.000000e+00 : f32
      %118 = vector.broadcast %cst_51 : f32 to vector<8x128xf32>
      %c0_52 = arith.constant 0 : index
      %c0_53 = arith.constant 0 : index
      %119 = vector.load %arg4[%c0_52, %c0_53] : memref<8x128xf32, #tpu.memory_space<vmem>>, vector<8x128xf32>
      tpu.vector_store %arg4[%c0_52, %c0_53], %118 {strides = array<i32>} : memref<8x128xf32, #tpu.memory_space<vmem>>, vector<8x128xf32>,
    } else {
    }
    %c0 = arith.constant 0 : index
    %c0_1 = arith.constant 0 : index
    %c0_2 = arith.constant 0 : index
    %3 = vector.load %arg2[%c0, %c0_1, %c0_2] : memref<14x8x128xf32, #tpu.memory_space<vmem>>, vector<1x8x128xf32>
    %4 = vector.shape_cast %3 : vector<1x8x128xf32> to vector<8x128xf32>
    %c1 = arith.constant 1 : index
    %c0_3 = arith.constant 0 : index
    %c0_4 = arith.constant 0 : index
    %5 = vector.load %arg2[%c1, %c0_3, %c0_4] : memref<14x8x128xf32, #tpu.memory_space<vmem>>, vector<1x8x128xf32>
    %6 = vector.shape_cast %5 : vector<1x8x128xf32> to vector<8x128xf32>
    %c2 = arith.constant 2 : index
    %c0_5 = arith.constant 0 : index
    %c0_6 = arith.constant 0 : index
    %7 = vector.load %arg2[%c2, %c0_5, %c0_6] : memref<14x8x128xf32, #tpu.memory_space<vmem>>, vector<1x8x128xf32>
    %8 = vector.shape_cast %7 : vector<1x8x128xf32> to vector<8x128xf32>
    %c3 = arith.constant 3 : index
    %c0_7 = arith.constant 0 : index
    %c0_8 = arith.constant 0 : index
    %9 = vector.load %arg2[%c3, %c0_7, %c0_8] : memref<14x8x128xf32, #tpu.memory_space<vmem>>, vector<1x8x128xf32>
    %10 = vector.shape_cast %9 : vector<1x8x128xf32> to vector<8x128xf32>
    %c4 = arith.constant 4 : index
    %c0_9 = arith.constant 0 : index
    %c0_10 = arith.constant 0 : index
    %11 = vector.load %arg2[%c4, %c0_9, %c0_10] : memref<14x8x128xf32, #tpu.memory_space<vmem>>, vector<1x8x128xf32>
    %12 = vector.shape_cast %11 : vector<1x8x128xf32> to vector<8x128xf32>
    %c5 = arith.constant 5 : index
    %c0_11 = arith.constant 0 : index
    %c0_12 = arith.constant 0 : index
    %13 = vector.load %arg2[%c5, %c0_11, %c0_12] : memref<14x8x128xf32, #tpu.memory_space<vmem>>, vector<1x8x128xf32>
    %14 = vector.shape_cast %13 : vector<1x8x128xf32> to vector<8x128xf32>
    %c6 = arith.constant 6 : index
    %c0_13 = arith.constant 0 : index
    %c0_14 = arith.constant 0 : index
    %15 = vector.load %arg2[%c6, %c0_13, %c0_14] : memref<14x8x128xf32, #tpu.memory_space<vmem>>, vector<1x8x128xf32>
    %16 = vector.shape_cast %15 : vector<1x8x128xf32> to vector<8x128xf32>
    %c7 = arith.constant 7 : index
    %c0_15 = arith.constant 0 : index
    %c0_16 = arith.constant 0 : index
    %17 = vector.load %arg2[%c7, %c0_15, %c0_16] : memref<14x8x128xf32, #tpu.memory_space<vmem>>, vector<1x8x128xf32>
    %18 = vector.shape_cast %17 : vector<1x8x128xf32> to vector<8x128xf32>
    %c8 = arith.constant 8 : index
    %c0_17 = arith.constant 0 : index
    %c0_18 = arith.constant 0 : index
    %19 = vector.load %arg2[%c8, %c0_17, %c0_18] : memref<14x8x128xf32, #tpu.memory_space<vmem>>, vector<1x8x128xf32>
    %20 = vector.shape_cast %19 : vector<1x8x128xf32> to vector<8x128xf32>
    %c9 = arith.constant 9 : index
    %c0_19 = arith.constant 0 : index
    %c0_20 = arith.constant 0 : index
    %21 = vector.load %arg2[%c9, %c0_19, %c0_20] : memref<14x8x128xf32, #tpu.memory_space<vmem>>, vector<1x8x128xf32>
    %22 = vector.shape_cast %21 : vector<1x8x128xf32> to vector<8x128xf32>
    %c10 = arith.constant 10 : index
    %c0_21 = arith.constant 0 : index
    %c0_22 = arith.constant 0 : index
    %23 = vector.load %arg2[%c10, %c0_21, %c0_22] : memref<14x8x128xf32, #tpu.memory_space<vmem>>, vector<1x8x128xf32>
    %24 = vector.shape_cast %23 : vector<1x8x128xf32> to vector<8x128xf32>
    %c11 = arith.constant 11 : index
    %c0_23 = arith.constant 0 : index
    %c0_24 = arith.constant 0 : index
    %25 = vector.load %arg2[%c11, %c0_23, %c0_24] : memref<14x8x128xf32, #tpu.memory_space<vmem>>, vector<1x8x128xf32>
    %26 = vector.shape_cast %25 : vector<1x8x128xf32> to vector<8x128xf32>
    %c12 = arith.constant 12 : index
    %c0_25 = arith.constant 0 : index
    %c0_26 = arith.constant 0 : index
    %27 = vector.load %arg2[%c12, %c0_25, %c0_26] : memref<14x8x128xf32, #tpu.memory_space<vmem>>, vector<1x8x128xf32>
    %28 = vector.shape_cast %27 : vector<1x8x128xf32> to vector<8x128xf32>
    %c13 = arith.constant 13 : index
    %c0_27 = arith.constant 0 : index
    %c0_28 = arith.constant 0 : index
    %29 = vector.load %arg2[%c13, %c0_27, %c0_28] : memref<14x8x128xf32, #tpu.memory_space<vmem>>, vector<1x8x128xf32>
    %30 = vector.shape_cast %29 : vector<1x8x128xf32> to vector<8x128xf32>
    %31 = arith.subf %4, %10 : vector<8x128xf32>
    %32 = math.absf %31 : vector<8x128xf32>
    %33 = arith.subf %6, %12 : vector<8x128xf32>
    %34 = math.absf %33 : vector<8x128xf32>
    %35 = arith.addf %32, %34 : vector<8x128xf32>
    %36 = arith.subf %8, %14 : vector<8x128xf32>
    %37 = math.absf %36 : vector<8x128xf32>
    %38 = arith.addf %35, %37 : vector<8x128xf32>
    %39 = arith.mulf %16, %16 : vector<8x128xf32>
    %40 = arith.mulf %18, %18 : vector<8x128xf32>
    %41 = arith.addf %39, %40 : vector<8x128xf32>
    %42 = arith.mulf %20, %20 : vector<8x128xf32>
    %43 = arith.addf %41, %42 : vector<8x128xf32>
    %44 = arith.mulf %22, %22 : vector<8x128xf32>
    %45 = arith.addf %43, %44 : vector<8x128xf32>
    %46 = arith.mulf %24, %24 : vector<8x128xf32>
    %47 = arith.mulf %26, %26 : vector<8x128xf32>
    %48 = arith.addf %46, %47 : vector<8x128xf32>
    %49 = arith.mulf %28, %28 : vector<8x128xf32>
    %50 = arith.addf %48, %49 : vector<8x128xf32>
    %51 = arith.mulf %30, %30 : vector<8x128xf32>
    %52 = arith.addf %50, %51 : vector<8x128xf32>
    %53 = arith.mulf %16, %24 : vector<8x128xf32>
    %54 = arith.mulf %18, %26 : vector<8x128xf32>
    %55 = arith.addf %53, %54 : vector<8x128xf32>
    %56 = arith.mulf %20, %28 : vector<8x128xf32>
    %57 = arith.addf %55, %56 : vector<8x128xf32>
    %58 = arith.mulf %22, %30 : vector<8x128xf32>
    %59 = arith.addf %57, %58 : vector<8x128xf32>
    %60 = arith.mulf %45, %52 : vector<8x128xf32>
    %cst = arith.constant 1.000000e-24 : f32
    %61 = vector.broadcast %cst : f32 to vector<8x128xf32>
    %62 = arith.maximumf %60, %61 : vector<8x128xf32>
    %63 = math.rsqrt %62 : vector<8x128xf32>
    %64 = arith.mulf %59, %63 : vector<8x128xf32>
    %65 = math.absf %64 : vector<8x128xf32>
    %cst_29 = arith.constant 1.000000e+00 : f32
    %66 = vector.broadcast %cst_29 : f32 to vector<8x128xf32>
    %67 = arith.minimumf %65, %66 : vector<8x128xf32>
    %cst_30 = arith.constant 1.000000e+00 : f32
    %68 = vector.broadcast %cst_30 : f32 to vector<8x128xf32>
    %69 = arith.subf %68, %67 : vector<8x128xf32>
    %cst_31 = arith.constant 0.000000e+00 : f32
    %70 = vector.broadcast %cst_31 : f32 to vector<8x128xf32>
    %71 = arith.maximumf %69, %70 : vector<8x128xf32>
    %72 = math.sqrt %71 : vector<8x128xf32>
    %cst_32 = arith.constant -1.872930e-02 : f32
    %73 = vector.broadcast %cst_32 : f32 to vector<8x128xf32>
    %74 = arith.mulf %67, %73 : vector<8x128xf32>
    %cst_33 = arith.constant 7.426100e-02 : f32
    %75 = vector.broadcast %cst_33 : f32 to vector<8x128xf32>
    %76 = arith.addf %75, %74 : vector<8x128xf32>
    %77 = arith.mulf %67, %76 : vector<8x128xf32>
    %cst_34 = arith.constant -0.212114394 : f32
    %78 = vector.broadcast %cst_34 : f32 to vector<8x128xf32>
    %79 = arith.addf %78, %77 : vector<8x128xf32>
    %80 = arith.mulf %67, %79 : vector<8x128xf32>
    %cst_35 = arith.constant 1.57072878 : f32
    %81 = vector.broadcast %cst_35 : f32 to vector<8x128xf32>
    %82 = arith.addf %81, %80 : vector<8x128xf32>
    %83 = arith.mulf %72, %82 : vector<8x128xf32>
    %cst_36 = arith.constant 2.000000e+00 : f32
    %84 = vector.broadcast %cst_36 : f32 to vector<8x128xf32>
    %85 = arith.mulf %84, %83 : vector<8x128xf32>
    %86 = arith.mulf %4, %4 : vector<8x128xf32>
    %87 = arith.mulf %6, %6 : vector<8x128xf32>
    %88 = arith.addf %86, %87 : vector<8x128xf32>
    %89 = arith.mulf %8, %8 : vector<8x128xf32>
    %90 = arith.addf %88, %89 : vector<8x128xf32>
    %91 = math.sqrt %90 : vector<8x128xf32>
    %cst_37 = arith.constant 5.000000e+00 : f32
    %92 = vector.broadcast %cst_37 : f32 to vector<8x128xf32>
    %93 = arith.subf %92, %91 : vector<8x128xf32>
    %cst_38 = arith.constant 0.000000e+00 : f32
    %94 = vector.broadcast %cst_38 : f32 to vector<8x128xf32>
    %95 = arith.maximumf %93, %94 : vector<8x128xf32>
    %cst_39 = arith.constant 5.000000e+01 : f32
    %96 = vector.broadcast %cst_39 : f32 to vector<8x128xf32>
    %97 = arith.subf %91, %96 : vector<8x128xf32>
    %cst_40 = arith.constant 5.000000e+01 : f32
    %98 = vector.broadcast %cst_40 : f32 to vector<8x128xf32>
    %99 = arith.subf %91, %98 : vector<8x128xf32>
    %100 = arith.mulf %97, %99 : vector<8x128xf32>
    %c0_41 = arith.constant 0 : index
    %c0_42 = arith.constant 0 : index
    %101 = vector.load %arg4[%c0_41, %c0_42] : memref<8x128xf32, #tpu.memory_space<vmem>>, vector<8x128xf32>
    %cst_43 = arith.constant 0.00333333341 : f32
    %102 = vector.broadcast %cst_43 : f32 to vector<8x128xf32>
    %103 = arith.mulf %102, %38 : vector<8x128xf32>
    %cst_44 = arith.constant 1.000000e-01 : f32
    %104 = vector.broadcast %cst_44 : f32 to vector<8x128xf32>
    %105 = arith.mulf %104, %85 : vector<8x128xf32>
    %106 = arith.addf %103, %105 : vector<8x128xf32>
    %cst_45 = arith.constant 0.00999999977 : f32
    %107 = vector.broadcast %cst_45 : f32 to vector<8x128xf32>
    %108 = arith.mulf %107, %95 : vector<8x128xf32>
    %109 = arith.addf %106, %108 : vector<8x128xf32>
    %cst_46 = arith.constant 9.99999997E-7 : f32
    %110 = vector.broadcast %cst_46 : f32 to vector<8x128xf32>
    %111 = arith.mulf %110, %100 : vector<8x128xf32>
    %112 = arith.addf %109, %111 : vector<8x128xf32>
    %113 = arith.addf %101, %112 : vector<8x128xf32>
    %c0_47 = arith.constant 0 : index
    %c0_48 = arith.constant 0 : index
    %114 = vector.load %arg4[%c0_47, %c0_48] : memref<8x128xf32, #tpu.memory_space<vmem>>, vector<8x128xf32>
    tpu.vector_store %arg4[%c0_47, %c0_48], %113 {strides = array<i32>} : memref<8x128xf32, #tpu.memory_space<vmem>>, vector<8x128xf32>,
    %c0_i32_49 = arith.constant 0 : i32
    %115 = arith.cmpi eq, %arg1, %c0_i32_49 : i32
    %116 = arith.extui %115 : i1 to i32
    %c0_i32_50 = arith.constant 0 : i32
    %117 = arith.cmpi ne, %116, %c0_i32_50 : i32
    scf.if %117 {
      %c0_51 = arith.constant 0 : index
      %c0_52 = arith.constant 0 : index
      %118 = vector.load %arg4[%c0_51, %c0_52] : memref<8x128xf32, #tpu.memory_space<vmem>>, vector<8x128xf32>
      %119 = vector.shape_cast %118 : vector<8x128xf32> to vector<1x8x128xf32>
      %cst_53 = arith.constant dense<0.000000e+00> : vector<1xf32>
      %120 = vector.multi_reduction <add>, %119, %cst_53 [1, 2] : vector<1x8x128xf32> to vector<1xf32>
      %121 = vector.shape_cast %120 : vector<1xf32> to vector<1x1x1xf32>
      %122 = vector.extract %121[0, 0, 0] : f32 from vector<1x1x1xf32>
      %cst_54 = arith.constant 6.250000e-02 : f32
      %123 = arith.mulf %122, %cst_54 : f32
      %124 = vector.broadcast %123 : f32 to vector<1x8x128xf32>
      %c0_55 = arith.constant 0 : index
      %c0_56 = arith.constant 0 : index
      %c0_57 = arith.constant 0 : index
      %125 = vector.load %arg3[%c0_55, %c0_56, %c0_57] : memref<1x8x128xf32, #tpu.memory_space<vmem>>, vector<1x8x128xf32>
      tpu.vector_store %arg3[%c0_55, %c0_56, %c0_57], %124 {strides = array<i32>} : memref<1x8x128xf32, #tpu.memory_space<vmem>>, vector<1x8x128xf32>,
    } else {
    }
    return
  }
  func.func @transform_0(%arg0: i32, %arg1: i32) -> (i32, i32, i32) {
    %c1_i32 = arith.constant 1 : i32
    %0 = arith.muli %arg0, %c1_i32 : i32
    %1 = arith.addi %0, %arg1 : i32
    %c0_i32 = arith.constant 0 : i32
    %c0_i32_0 = arith.constant 0 : i32
    %c0_i32_1 = arith.constant 0 : i32
    return %c0_i32, %c0_i32_0, %1 : i32, i32, i32
  }
  func.func @transform_1(%arg0: i32, %arg1: i32) -> (i32, i32, i32) {
    %c0_i32 = arith.constant 0 : i32
    %c0_i32_0 = arith.constant 0 : i32
    %c0_i32_1 = arith.constant 0 : i32
    return %arg0, %c0_i32, %c0_i32_0 : i32, i32, i32
  }
}

</mosaic_0001>

<llo_original>
// kernel: relative_motion_loss.1
$region0: #{relative_motion_loss.1}
  #allocation0 [shape = 'u32[]', space=smem, size = 0x4, offset = 0x4, fixed_abs, tag = 'smem constant byte address 0x4 - core index']
  #allocation1 [shape = 'u32[144,128]{1,0:T(1,128)}', space=vmem, size = 0x12000, scoped, tag = 'internal scratch']
  #allocation2 [shape = 'f32[8,128]{1,0:T(8,128)}', space=vmem, size = 0x1000, scoped, tag = 'scratch operand']
  %s0 = inlined_call_operand.vmem [shape: f32[14,8,128], index: 0, kind: input, shape index: {}]
  %s1 = inlined_call_operand.vmem [shape: f32[1,8,128], index: 1, kind: output, shape index: {}]
  %s2 = sld [smem:[#allocation0]]
  $region22: #{relative_motion_loss.1} parent=0
    _
  %s4 = ssub.s32 1, %s2
  %s5 = scalar_select 0, %s4, %s2
  // Predicated region
  $region2: #{relative_motion_loss.1} parent=0 // pred_check
    _
  $region3: #{relative_motion_loss.1} parent=0 // pred_check_branch
    %7 = sbr.rel (0) target = $region5
  $region4: #{relative_motion_loss.1} parent=0 // pred_region
    %s8 = sadd.s32 0, 0
    %p9 = scmp.lt.s32.totalorder %s8, 0
    %s10 = scalar_select %p9, %s8, 0
    %s11 = smul.addr %s10, 8
    %s12 = scalar_lea.vmem %s0, %s11
    %s13 = sadd.s32 0, 0
  $region5: #{relative_motion_loss.1} parent=0 // pred_fallthru
    _
  %s14 = sadd.s32 0, 0
  %p15 = scmp.lt.s32.totalorder %s14, 0
  %s16 = scalar_select %p15, %s14, 0
  %s17 = smul.addr %s16, 8
  %s18 = scalar_lea.vmem %s0, %s17
  %s19 = sadd.s32 0, 0
  %p20 = scmp.lt.s32.totalorder %s19, 0
  %s21 = scalar_select %p20, %s19, 0
  %s22 = smul.addr %s21, 8
  %s23 = scalar_lea.vmem %s0, %s22
  %s24 = sadd.s32 0, 0
  %p25 = scmp.eq.s32.totalorder 0, 0
  // Predicated region
  $region6: #{relative_motion_loss.1} parent=0 // pred_check
    %p26 = pneg %p25
  $region7: #{relative_motion_loss.1} parent=0 // pred_check_branch
    %28 = sbr.rel (%p26) target = $region9
  $region8: #{relative_motion_loss.1} parent=0 // pred_region
    %29 = vst [vmem:[#allocation2] sm:$0xff] 0.0
  $region9: #{relative_motion_loss.1} parent=0 // pred_fallthru
    _
  %v30 = vld [vmem:[%s23] sm:$0xff]
  %s31 = scalar_lea.vmem %s23, 8
  %v32 = vld [vmem:[%s31] sm:$0xff]
  %s33 = scalar_lea.vmem %s23, 16
  %v34 = vld [vmem:[%s33] sm:$0xff]
  %s35 = scalar_lea.vmem %s23, 24
  %v36 = vld [vmem:[%s35] sm:$0xff]
  %s37 = scalar_lea.vmem %s23, 32
  %v38 = vld [vmem:[%s37] sm:$0xff]
  %s39 = scalar_lea.vmem %s23, 40
  %v40 = vld [vmem:[%s39] sm:$0xff]
  %s41 = scalar_lea.vmem %s23, 48
  %v42 = vld [vmem:[%s41] sm:$0xff]
  %s43 = scalar_lea.vmem %s23, 56
  %v44 = vld [vmem:[%s43] sm:$0xff]
  %s45 = scalar_lea.vmem %s23, 64
  %v46 = vld [vmem:[%s45] sm:$0xff]
  %s47 = scalar_lea.vmem %s23, 72
  %v48 = vld [vmem:[%s47] sm:$0xff]
  %s49 = scalar_lea.vmem %s23, 80
  %v50 = vld [vmem:[%s49] sm:$0xff]
  %s51 = scalar_lea.vmem %s23, 88
  %v52 = vld [vmem:[%s51] sm:$0xff]
  %s53 = scalar_lea.vmem %s23, 96
  %v54 = vld [vmem:[%s53] sm:$0xff]
  %s55 = scalar_lea.vmem %s23, 104
  %v56 = vld [vmem:[%s55] sm:$0xff]
  %v57 = vsub.f32 %v30, %v36
  %v58 = vand.u32 2147483647, %v57
  %v59 = vsub.f32 %v32, %v38
  %v60 = vand.u32 2147483647, %v59
  %v61 = vadd.f32 %v58, %v60
  %v62 = vsub.f32 %v34, %v40
  %v63 = vand.u32 2147483647, %v62
  %v64 = vadd.f32 %v61, %v63
  %v65 = vmul.f32 %v42, %v42
  %v66 = vmul.f32 %v44, %v44
  %v67 = vadd.f32 %v65, %v66
  %v68 = vmul.f32 %v46, %v46
  %v69 = vadd.f32 %v67, %v68
  %v70 = vmul.f32 %v48, %v48
  %v71 = vadd.f32 %v69, %v70
  %v72 = vmul.f32 %v50, %v50
  %v73 = vmul.f32 %v52, %v52
  %v74 = vadd.f32 %v72, %v73
  %v75 = vmul.f32 %v54, %v54
  %v76 = vadd.f32 %v74, %v75
  %v77 = vmul.f32 %v56, %v56
  %v78 = vadd.f32 %v76, %v77
  %v79 = vmul.f32 %v42, %v50
  %v80 = vmul.f32 %v44, %v52
  %v81 = vadd.f32 %v79, %v80
  %v82 = vmul.f32 %v46, %v54
  %v83 = vadd.f32 %v81, %v82
  %v84 = vmul.f32 %v48, %v56
  %v85 = vadd.f32 %v83, %v84
  %v86 = vmul.f32 %v71, %v78
  %v87 = vmax.f32 %v86, 1e-24
  %v88 = vrsqrt.pop %v87
  %v89 = vmul.f32 %v85, %v88
  %v90 = vand.u32 2147483647, %v89
  %v91 = vmin.f32 %v90, 1.0
  %v92 = vsub.f32 1.0, %v91
  %v93 = vmax.f32 %v92, 0.0
  %v94 = vrsqrt.pop %v93
  %v95 = vmul.f32 %v93, %v94
  %vm96 = vcmp.eq.f32.partialorder %v93, inf
  %v97 = vsel %vm96, %v93, %v95
  %vm98 = vcmp.eq.f32.partialorder %v93, 0.0
  %v99 = vand.u32 %v93, 2147483648
  %v100 = vsel %vm98, %v99, %v97
  %v101 = vmul.f32 %v91, -0.0187293
  %v102 = vadd.f32 %v101, 0.074261
  %v103 = vmul.f32 %v91, %v102
  %v104 = vadd.f32 %v103, -0.2121144
  %v105 = vmul.f32 %v91, %v104
  %v106 = vadd.f32 %v105, 1.5707288
  %v107 = vmul.f32 %v100, %v106
  %v108 = vmul.f32 %v107, 2.0
  %v109 = vmul.f32 %v30, %v30
  %v110 = vmul.f32 %v32, %v32
  %v111 = vadd.f32 %v109, %v110
  %v112 = vmul.f32 %v34, %v34
  %v113 = vadd.f32 %v111, %v112
  %v114 = vrsqrt.pop %v113
  %v115 = vmul.f32 %v113, %v114
  %vm116 = vcmp.eq.f32.partialorder %v113, inf
  %v117 = vsel %vm116, %v113, %v115
  %vm118 = vcmp.eq.f32.partialorder %v113, 0.0
  %v119 = vand.u32 %v113, 2147483648
  %v120 = vsel %vm118, %v119, %v117
  %v121 = vsub.f32 5.0, %v120
  %v122 = vmax.f32 %v121, 0.0
  %v123 = vsub.f32 %v120, 50.0
  %v124 = vmul.f32 %v123, %v123
  %v125 = vld [vmem:[#allocation2] sm:$0xff]
  %v126 = vmul.f32 %v64, 0.0033333334
  %v127 = vmul.f32 %v108, 0.1
  %v128 = vadd.f32 %v126, %v127
  %v129 = vmul.f32 %v122, 0.01
  %v130 = vadd.f32 %v128, %v129
  %v131 = vmul.f32 %v124, 1e-06
  %v132 = vadd.f32 %v130, %v131
  %v133 = vadd.f32 %v125, %v132
  %134 = vst [vmem:[#allocation2] sm:$0xff] %v133
  // Predicated region
  $region10: #{relative_motion_loss.1} parent=0 // pred_check
    %p135 = pneg %p25
  $region11: #{relative_motion_loss.1} parent=0 // pred_check_branch
    %137 = sbr.rel (%p135) target = $region13
  $region12: #{relative_motion_loss.1} parent=0 // pred_region
    %v138 = vld [vmem:[#allocation2] sm:$0xff]
    %139 = vadd.xlane.f32.xlu0 %v138
    %v140 = vpop.xlane.xlu0 %139
    %v141 = vrot.slane %v140, 4
    %v142 = vadd.f32 %v140, %v141
    %v143 = vrot.slane %v142, 2
    %v144 = vadd.f32 %v142, %v143
    %v145 = vrot.slane %v144, 1
    %v146 = vadd.f32 %v144, %v145
    %s147 = vtos %v146
    %s148 = smul.f32 %s147, 0.0625
    %v149 = vstv %s148
    %150 = vst [vmem:[%s1] sm:$0xff] %v149
  $region13: #{relative_motion_loss.1} parent=0 // pred_fallthru
    _
  // Predicated region
  $region14: #{relative_motion_loss.1} parent=0 // pred_check
    _
  $region15: #{relative_motion_loss.1} parent=0 // pred_check_branch
    %152 = sbr.rel (0) target = $region17
  $region16: #{relative_motion_loss.1} parent=0 // pred_region
    _
  $region17: #{relative_motion_loss.1} parent=0 // pred_fallthru
    _
  // Predicated region
  $region18: #{relative_motion_loss.1} parent=0 // pred_check
    _
  $region19: #{relative_motion_loss.1} parent=0 // pred_check_branch
    %154 = sbr.rel (0) target = $region21
  $region20: #{relative_motion_loss.1} parent=0 // pred_region
    _
  $region21: #{relative_motion_loss.1} parent=0 // pred_fallthru
    _

</llo_original>
